<compile_context>
chip_gen: v7x
topology: tpu7x:2x2x1
jax: 0.10.0
libtpu: 0.0.40
codegen_flags: <defaults>
</compile_context>

<pallas_src>
import jax
import jax.numpy as jnp
from jax import lax
from jax.experimental import pallas as pl
from jax.experimental.pallas import tpu as pltpu


def _round_up(x, m):
    return ((x + m - 1) // m) * m


def _pick_vocab_tile(vp, max_tile=512):
    tv = min(vp, max_tile)
    while vp % tv != 0:
        tv -= 128
    return tv


def _pick_batch_block(b, max_bb=8):
    bb = min(b, max_bb)
    while b % bb != 0:
        bb -= 1
    return bb


def _seq2seq_kernel(src_emb_ref,          # (BB, S, Hp) bf16
                    tgt_emb_ref,          # (BB, T, Hp) f32
                    mask_ref,             # (BB, 1, S)  f32  (1.0 = attend)
                    w_enc_ref,            # (Hp, Hp)    bf16
                    w_dec_ref,            # (Hp, Hp)    bf16
                    w_out_ref,            # (Hp, TV)    bf16
                    pred_ref,             # (BB, T, TV) f32
                    h_ref):               # scratch (BB*T, Hp) bf16
    # All program_id use stays at the kernel top level (interpret-safe).
    v = pl.program_id(1)

    # ---- encoder + attention + decoder hidden: once per batch block --------
    @pl.when(v == 0)
    def _compute_decoder_state():
        src = src_emb_ref[...]                       # (BB, S, Hp) bf16
        tgt_f32 = tgt_emb_ref[...]                   # (BB, T, Hp) f32
        tgt = tgt_f32.astype(jnp.bfloat16)
        bb, s, hp = src.shape
        t = tgt.shape[1]

        # encoder: tanh(src @ W_enc), bf16 operands, f32 accumulate
        enc_f32 = jnp.tanh(lax.dot_general(
            src, w_enc_ref[...],
            dimension_numbers=(((2,), (0,)), ((), ())),
            preferred_element_type=jnp.float32))     # (BB, S, Hp)
        enc = enc_f32.astype(jnp.bfloat16)

        # attention scores: contract last dims directly (no transpose of enc)
        scores = lax.dot_general(
            tgt, enc,
            dimension_numbers=(((2,), (2,)), ((0,), (0,))),
            preferred_element_type=jnp.float32)      # (BB, T, S) f32
        mask = mask_ref[...]                         # (BB, 1, S) f32
        scores = jnp.where(mask > 0.5, scores, jnp.float32(-1e9))
        scores = scores - jnp.max(scores, axis=-1, keepdims=True)
        p = jnp.exp(scores)
        p = p / jnp.sum(p, axis=-1, keepdims=True)

        ctx = lax.dot_general(
            p.astype(jnp.bfloat16), enc,
            dimension_numbers=(((2,), (1,)), ((0,), (0,))),
            preferred_element_type=jnp.float32)      # (BB, T, Hp) f32

        h = jnp.tanh(lax.dot_general(
            (tgt_f32 + ctx).astype(jnp.bfloat16), w_dec_ref[...],
            dimension_numbers=(((2,), (0,)), ((), ())),
            preferred_element_type=jnp.float32))     # (BB, T, Hp) f32

        h_ref[...] = h.reshape(bb * t, hp).astype(jnp.bfloat16)

    # ---- vocab projection for this V tile (every grid step) ----------------
    bb, t, tv = pred_ref.shape
    pred = jnp.dot(h_ref[...], w_out_ref[...],
                   preferred_element_type=jnp.float32)   # (BB*T, TV)
    pred_ref[...] = pred.reshape(bb, t, tv)


def seq2seq_forward(src_tokens, tgt_tokens, src_seq_len, params):
    """Returns {'pred': [B, T, V]} matching Seq2SeqModel.forward semantics."""
    emb_src = params["emb_src"]      # (V, H) f32
    emb_tgt = params["emb_tgt"]      # (V, H) f32
    w_enc = params["w_enc"]          # (H, H) f32
    w_dec = params["w_dec"]          # (H, H) f32
    w_out = params["w_out"]          # (H, V) f32

    B, S = src_tokens.shape
    _, T = tgt_tokens.shape
    H = emb_src.shape[1]
    V = w_out.shape[1]

    # Lane-dense padding: hidden and vocab padded to multiples of 128.
    Hp = _round_up(H, 128)
    Vp = _round_up(V, 128)
    TV = _pick_vocab_tile(Vp)            # vocab tile (<=512 -> v7x VMEM safe)
    BB = _pick_batch_block(B)            # batch rows per grid step

    # Pad parameters (zeros in padded dims keep the math exact) + cast weights
    # and src embeddings to bf16 (MXU operands); tgt embedding stays f32 since
    # it also feeds the f32 residual add.
    emb_src_p = jnp.pad(emb_src, ((0, 0), (0, Hp - H))).astype(jnp.bfloat16)
    emb_tgt_p = jnp.pad(emb_tgt, ((0, 0), (0, Hp - H))).astype(jnp.float32)
    w_enc_p = jnp.pad(w_enc, ((0, Hp - H), (0, Hp - H))).astype(jnp.bfloat16)
    w_dec_p = jnp.pad(w_dec, ((0, Hp - H), (0, Hp - H))).astype(jnp.bfloat16)
    w_out_p = jnp.pad(w_out, ((0, Hp - H), (0, Vp - V))).astype(jnp.bfloat16)

    # Glue: embedding gathers (token lookup) stay outside the kernel.
    src_emb = emb_src_p[src_tokens]                  # (B, S, Hp) bf16
    tgt_emb = emb_tgt_p[tgt_tokens]                  # (B, T, Hp) f32

    # Encoder attend-mask (1.0 where valid), tiny (B,1,S) f32 array.
    enc_mask = (jnp.arange(S)[None, :] <
                src_seq_len.astype(jnp.int32)[:, None]).astype(jnp.float32)
    enc_mask = enc_mask[:, None, :]                  # (B, 1, S)

    grid = (B // BB, Vp // TV)

    pred_p = pl.pallas_call(
        _seq2seq_kernel,
        out_shape=jax.ShapeDtypeStruct((B, T, Vp), jnp.float32),
        grid=grid,
        in_specs=[
            pl.BlockSpec((BB, S, Hp), lambda b, v: (b, 0, 0)),   # src_emb
            pl.BlockSpec((BB, T, Hp), lambda b, v: (b, 0, 0)),   # tgt_emb
            pl.BlockSpec((BB, 1, S), lambda b, v: (b, 0, 0)),    # enc_mask
            pl.BlockSpec((Hp, Hp), lambda b, v: (0, 0)),         # w_enc
            pl.BlockSpec((Hp, Hp), lambda b, v: (0, 0)),         # w_dec
            pl.BlockSpec((Hp, TV), lambda b, v: (0, v)),         # w_out tile
        ],
        out_specs=pl.BlockSpec((BB, T, TV), lambda b, v: (b, 0, v)),
        scratch_shapes=[pltpu.VMEM((BB * T, Hp), jnp.bfloat16)],
        compiler_params=pltpu.CompilerParams(
            dimension_semantics=("parallel", "arbitrary")),
    )(src_emb, tgt_emb, enc_mask, w_enc_p, w_dec_p, w_out_p)

    return {"pred": pred_p[..., :V]}


def _reference_forward(src_tokens, tgt_tokens, src_seq_len, params):
    """Pure-JAX f32 reference for correctness checking."""
    src_emb = params["emb_src"][src_tokens]
    tgt_emb = params["emb_tgt"][tgt_tokens]
    B, S = src_tokens.shape
    pos = jnp.arange(S)[None, :]
    mask = (pos < src_seq_len[:, None]).astype(jnp.float32)          # (B, S)

    enc = jnp.tanh(jnp.einsum("bsh,hk->bsk", src_emb, params["w_enc"]))
    scores = jnp.einsum("bth,bsh->bts", tgt_emb, enc)
    scores = jnp.where(mask[:, None, :] > 0.5, scores, -1e9)
    p = jax.nn.softmax(scores, axis=-1)
    ctx = jnp.einsum("bts,bsh->bth", p, enc)
    h = jnp.tanh(jnp.einsum("bth,hk->btk", tgt_emb + ctx, params["w_dec"]))
    return jnp.einsum("bth,hv->btv", h, params["w_out"])


if __name__ == "__main__":
    # Small deterministic shapes: batch=2, src_len=8, tgt_len=8, hidden=32, vocab=64
    B, S, T, H, V = 2, 8, 8, 32, 64
    key = jax.random.PRNGKey(0)
    k1, k2, k3, k4, k5, k6, k7 = jax.random.split(key, 7)

    params = {
        "emb_src": 0.1 * jax.random.normal(k1, (V, H), jnp.float32),
        "emb_tgt": 0.1 * jax.random.normal(k2, (V, H), jnp.float32),
        "w_enc":   0.1 * jax.random.normal(k3, (H, H), jnp.float32),
        "w_dec":   0.1 * jax.random.normal(k4, (H, H), jnp.float32),
        "w_out":   0.1 * jax.random.normal(k5, (H, V), jnp.float32),
    }

    src_tokens = jax.random.randint(k6, (B, S), 0, V, dtype=jnp.int32)
    tgt_tokens = jax.random.randint(k7, (B, T), 0, V, dtype=jnp.int32)
    src_seq_len = jnp.array([S, S - 3], dtype=jnp.int32)

    out = seq2seq_forward(src_tokens, tgt_tokens, src_seq_len, params)
    pred = jax.block_until_ready(out["pred"])
    assert pred.shape == (B, T, V), pred.shape

    ref = _reference_forward(src_tokens, tgt_tokens, src_seq_len, params)
    # bf16 MXU operands (f32 accumulation) -> compare with loosened tolerance.
    assert jnp.allclose(pred, ref, atol=1e-2, rtol=5e-2), "mismatch vs reference"

    print("KERNEL_OK")
</pallas_src>

<mosaic_0001>
module attributes {stable_mosaic.version = 11 : i64} {
  func.func @_seq2seq_kernel(%arg0: i32, %arg1: i32, %arg2: memref<2x8x128xbf16, #tpu.memory_space<vmem>>, %arg3: memref<2x8x128xf32, #tpu.memory_space<vmem>>, %arg4: memref<2x1x8xf32, #tpu.memory_space<vmem>>, %arg5: memref<128x128xbf16, #tpu.memory_space<vmem>>, %arg6: memref<128x128xbf16, #tpu.memory_space<vmem>>, %arg7: memref<128x128xbf16, #tpu.memory_space<vmem>>, %arg8: memref<2x8x128xf32, #tpu.memory_space<vmem>>, %arg9: memref<16x128xbf16, #tpu.memory_space<vmem>>) attributes {dimension_semantics = [#tpu.dimension_semantics<parallel>, #tpu.dimension_semantics<arbitrary>], iteration_bounds = array<i64: 1, 1>, scalar_prefetch = 0 : i64, scratch_operands = 1 : i64, tpu.core_type = #tpu.core_type<tc>, window_params = [{transform_indices = @transform_0, window_bounds = array<i64: 2, 8, 128>}, {transform_indices = @transform_1, window_bounds = array<i64: 2, 8, 128>}, {transform_indices = @transform_2, window_bounds = array<i64: 2, 1, 8>}, {pipeline_mode = #tpu.pipeline_mode<synchronous>, transform_indices = @transform_3, window_bounds = array<i64: 128, 128>}, {pipeline_mode = #tpu.pipeline_mode<synchronous>, transform_indices = @transform_4, window_bounds = array<i64: 128, 128>}, {transform_indices = @transform_5, window_bounds = array<i64: 128, 128>}, {transform_indices = @transform_6, window_bounds = array<i64: 2, 8, 128>}]} {
    %c0_i32 = arith.constant 0 : i32
    %0 = arith.cmpi eq, %arg1, %c0_i32 : i32
    %1 = arith.extui %0 : i1 to i32
    %c0_i32_0 = arith.constant 0 : i32
    %2 = arith.cmpi ne, %1, %c0_i32_0 : i32
    scf.if %2 {
      %c0_7 = arith.constant 0 : index
      %c0_8 = arith.constant 0 : index
      %c0_9 = arith.constant 0 : index
      %8 = vector.load %arg2[%c0_7, %c0_8, %c0_9] : memref<2x8x128xbf16, #tpu.memory_space<vmem>>, vector<2x8x128xbf16>
      %c0_10 = arith.constant 0 : index
      %c0_11 = arith.constant 0 : index
      %c0_12 = arith.constant 0 : index
      %9 = vector.load %arg3[%c0_10, %c0_11, %c0_12] : memref<2x8x128xf32, #tpu.memory_space<vmem>>, vector<2x8x128xf32>
      %10 = arith.truncf %9 : vector<2x8x128xf32> to vector<2x8x128xbf16>
      %c0_13 = arith.constant 0 : index
      %c0_14 = arith.constant 0 : index
      %11 = vector.load %arg5[%c0_13, %c0_14] : memref<128x128xbf16, #tpu.memory_space<vmem>>, vector<128x128xbf16>
      %cst_15 = arith.constant dense<0.000000e+00> : vector<2x8x128xf32>
      %12 = tpu.matmul %8, %11, %cst_15 {dimension_numbers = #tpu.dot_dimension_numbers<[2], [0], [0, 1], [1], [0, 0, 0, 1, 1, 1], [], []>} : vector<2x8x128xbf16>, vector<128x128xbf16>, vector<2x8x128xf32> -> vector<2x8x128xf32>
      %13 = math.tanh %12 : vector<2x8x128xf32>
      %14 = arith.truncf %13 : vector<2x8x128xf32> to vector<2x8x128xbf16>
      %cst_16 = arith.constant dense<0.000000e+00> : vector<2x8x8xf32>
      %15 = tpu.matmul %10, %14, %cst_16 {dimension_numbers = #tpu.dot_dimension_numbers<[2], [2], [1], [1], [0, 0, 0, 1, 1, 1], [0], [0]>} : vector<2x8x128xbf16>, vector<2x8x128xbf16>, vector<2x8x8xf32> -> vector<2x8x8xf32>
      %c0_17 = arith.constant 0 : index
      %c0_18 = arith.constant 0 : index
      %c0_19 = arith.constant 0 : index
      %16 = vector.load %arg4[%c0_17, %c0_18, %c0_19] : memref<2x1x8xf32, #tpu.memory_space<vmem>>, vector<2x1x8xf32>
      %cst_20 = arith.constant 5.000000e-01 : f32
      %17 = vector.broadcast %cst_20 : f32 to vector<2x1x8xf32>
      %18 = arith.cmpf ogt, %16, %17 : vector<2x1x8xf32>
      %cst_21 = arith.constant -1.000000e+09 : f32
      %19 = vector.shape_cast %18 : vector<2x1x8xi1> to vector<2x1x8xi1>
      %20 = vector.broadcast %19 : vector<2x1x8xi1> to vector<2x8x8xi1>
      %21 = vector.broadcast %cst_21 : f32 to vector<2x8x8xf32>
      %22 = arith.select %20, %15, %21 : vector<2x8x8xi1>, vector<2x8x8xf32>
      %cst_22 = arith.constant dense<0xFF800000> : vector<2x8xf32>
      %23 = vector.multi_reduction <maximumf>, %22, %cst_22 [2] : vector<2x8x8xf32> to vector<2x8xf32>
      %24 = vector.shape_cast %23 : vector<2x8xf32> to vector<2x8x1xf32>
      %25 = vector.broadcast %24 : vector<2x8x1xf32> to vector<2x8x8xf32>
      %26 = arith.subf %22, %25 : vector<2x8x8xf32>
      %27 = math.exp %26 : vector<2x8x8xf32>
      %cst_23 = arith.constant dense<0.000000e+00> : vector<2x8xf32>
      %28 = vector.multi_reduction <add>, %27, %cst_23 [2] : vector<2x8x8xf32> to vector<2x8xf32>
      %29 = vector.shape_cast %28 : vector<2x8xf32> to vector<2x8x1xf32>
      %30 = vector.broadcast %29 : vector<2x8x1xf32> to vector<2x8x8xf32>
      %31 = arith.divf %27, %30 : vector<2x8x8xf32>
      %32 = arith.truncf %31 : vector<2x8x8xf32> to vector<2x8x8xbf16>
      %cst_24 = arith.constant dense<0.000000e+00> : vector<2x8x128xf32>
      %33 = tpu.matmul %32, %14, %cst_24 {dimension_numbers = #tpu.dot_dimension_numbers<[2], [1], [1], [2], [0, 0, 0, 1, 1, 2], [0], [0]>} : vector<2x8x8xbf16>, vector<2x8x128xbf16>, vector<2x8x128xf32> -> vector<2x8x128xf32>
      %34 = arith.addf %9, %33 : vector<2x8x128xf32>
      %35 = arith.truncf %34 : vector<2x8x128xf32> to vector<2x8x128xbf16>
      %c0_25 = arith.constant 0 : index
      %c0_26 = arith.constant 0 : index
      %36 = vector.load %arg6[%c0_25, %c0_26] : memref<128x128xbf16, #tpu.memory_space<vmem>>, vector<128x128xbf16>
      %cst_27 = arith.constant dense<0.000000e+00> : vector<2x8x128xf32>
      %37 = tpu.matmul %35, %36, %cst_27 {dimension_numbers = #tpu.dot_dimension_numbers<[2], [0], [0, 1], [1], [0, 0, 0, 1, 1, 1], [], []>} : vector<2x8x128xbf16>, vector<128x128xbf16>, vector<2x8x128xf32> -> vector<2x8x128xf32>
      %38 = math.tanh %37 : vector<2x8x128xf32>
      %39 = vector.shape_cast %38 : vector<2x8x128xf32> to vector<16x128xf32>
      %40 = arith.truncf %39 : vector<16x128xf32> to vector<16x128xbf16>
      %c0_28 = arith.constant 0 : index
      %c0_29 = arith.constant 0 : index
      %41 = vector.load %arg9[%c0_28, %c0_29] : memref<16x128xbf16, #tpu.memory_space<vmem>>, vector<16x128xbf16>
      tpu.vector_store %arg9[%c0_28, %c0_29], %40 {strides = array<i32>} : memref<16x128xbf16, #tpu.memory_space<vmem>>, vector<16x128xbf16>,
    } else {
    }
    %c0 = arith.constant 0 : index
    %c0_1 = arith.constant 0 : index
    %3 = vector.load %arg9[%c0, %c0_1] : memref<16x128xbf16, #tpu.memory_space<vmem>>, vector<16x128xbf16>
    %c0_2 = arith.constant 0 : index
    %c0_3 = arith.constant 0 : index
    %4 = vector.load %arg7[%c0_2, %c0_3] : memref<128x128xbf16, #tpu.memory_space<vmem>>, vector<128x128xbf16>
    %cst = arith.constant dense<0.000000e+00> : vector<16x128xf32>
    %5 = tpu.matmul %3, %4, %cst {dimension_numbers = #tpu.dot_dimension_numbers<[1], [0], [0], [1], [0, 0, 1, 1], [], []>} : vector<16x128xbf16>, vector<128x128xbf16>, vector<16x128xf32> -> vector<16x128xf32>
    %6 = vector.shape_cast %5 : vector<16x128xf32> to vector<2x8x128xf32>
    %c0_4 = arith.constant 0 : index
    %c0_5 = arith.constant 0 : index
    %c0_6 = arith.constant 0 : index
    %7 = vector.load %arg8[%c0_4, %c0_5, %c0_6] : memref<2x8x128xf32, #tpu.memory_space<vmem>>, vector<2x8x128xf32>
    tpu.vector_store %arg8[%c0_4, %c0_5, %c0_6], %6 {strides = array<i32>} : memref<2x8x128xf32, #tpu.memory_space<vmem>>, vector<2x8x128xf32>,
    return
  }
  func.func @transform_0(%arg0: i32, %arg1: i32) -> (i32, i32, i32) {
    %c0_i32 = arith.constant 0 : i32
    %c0_i32_0 = arith.constant 0 : i32
    %c0_i32_1 = arith.constant 0 : i32
    return %arg0, %c0_i32, %c0_i32_0 : i32, i32, i32
  }
  func.func @transform_1(%arg0: i32, %arg1: i32) -> (i32, i32, i32) {
    %c0_i32 = arith.constant 0 : i32
    %c0_i32_0 = arith.constant 0 : i32
    %c0_i32_1 = arith.constant 0 : i32
    return %arg0, %c0_i32, %c0_i32_0 : i32, i32, i32
  }
  func.func @transform_2(%arg0: i32, %arg1: i32) -> (i32, i32, i32) {
    %c0_i32 = arith.constant 0 : i32
    %c0_i32_0 = arith.constant 0 : i32
    %c0_i32_1 = arith.constant 0 : i32
    return %arg0, %c0_i32, %c0_i32_0 : i32, i32, i32
  }
  func.func @transform_3(%arg0: i32, %arg1: i32) -> (i32, i32) {
    %c0_i32 = arith.constant 0 : i32
    %c0_i32_0 = arith.constant 0 : i32
    %c0_i32_1 = arith.constant 0 : i32
    return %c0_i32, %c0_i32_0 : i32, i32
  }
  func.func @transform_4(%arg0: i32, %arg1: i32) -> (i32, i32) {
    %c0_i32 = arith.constant 0 : i32
    %c0_i32_0 = arith.constant 0 : i32
    %c0_i32_1 = arith.constant 0 : i32
    return %c0_i32, %c0_i32_0 : i32, i32
  }
  func.func @transform_5(%arg0: i32, %arg1: i32) -> (i32, i32) {
    %c0_i32 = arith.constant 0 : i32
    %c0_i32_0 = arith.constant 0 : i32
    return %c0_i32, %arg1 : i32, i32
  }
  func.func @transform_6(%arg0: i32, %arg1: i32) -> (i32, i32, i32) {
    %c0_i32 = arith.constant 0 : i32
    %c0_i32_0 = arith.constant 0 : i32
    return %arg0, %c0_i32, %arg1 : i32, i32, i32
  }
}

</mosaic_0001>

<llo_original>
// kernel: tpu_custom_call.1
$region0: #{tpu_custom_call.1}
  #allocation0 [shape = 'u32[]', space=smem, size = 0x4, offset = 0x4, fixed_abs, tag = 'smem constant byte address 0x4 - core index']
  #allocation1 [shape = 'u32[144,128]{1,0:T(1,128)}', space=vmem, size = 0x12000, scoped, tag = 'internal scratch']
  #allocation2 [shape = 'bf16[16,128]{1,0:T(16,128)(2,1)}', space=vmem, size = 0x1000, scoped, tag = 'scratch operand']
  %s0 = inlined_call_operand.hbm [shape: bf16[2,8,128], index: 0, kind: input, shape index: {}]
  %s1 = inlined_call_operand.hbm [shape: f32[2,8,128], index: 1, kind: input, shape index: {}]
  %s2 = inlined_call_operand.vmem [shape: f32[2,1,8], index: 2, kind: input, shape index: {}]
  %s3 = inlined_call_operand.hbm [shape: bf16[128,128], index: 3, kind: input, shape index: {}]
  %s4 = inlined_call_operand.hbm [shape: bf16[128,128], index: 4, kind: input, shape index: {}]
  %s5 = inlined_call_operand.hbm [shape: bf16[128,128], index: 5, kind: input, shape index: {}]
  %s6 = inlined_call_operand.hbm [shape: f32[2,8,128], index: 6, kind: output, shape index: {}]
  %s7 = sld [smem:[#allocation0]]
  $region58: #{tpu_custom_call.1} parent=0
    _
  %s9 = ssub.s32 1, %s7
  %s10 = scalar_select 0, %s9, %s7
  $region1: #{tpu_custom_call.1} parent=0
    #allocation3 [shape = 'u8[4096]{0}', space=vmem, size = 0x1000, scoped, tag = 'input window, operand 0, single buffered']
    #allocation4 [shape = 's32[1]{0}', space=sflag, size = 0x4, scoped, tag = 'scoped memory for tpu_custom_call.1']
    #allocation5 [shape = 's32[1]{0}', space=sflag, size = 0x4, scoped, tag = 'scoped memory for tpu_custom_call.1']
    #allocation6 [shape = 'u8[8192]{0}', space=vmem, size = 0x2000, scoped, tag = 'input window, operand 1, single buffered']
    #allocation7 [shape = 's32[1]{0}', space=sflag, size = 0x4, scoped, tag = 'scoped memory for tpu_custom_call.1']
    #allocation8 [shape = 'u8[32768]{0}', space=vmem, size = 0x8000, scoped, tag = 'input window, operand 3, single buffered']
    #allocation9 [shape = 'u8[32768]{0}', space=vmem, size = 0x8000, scoped, tag = 'input window, operand 4, single buffered']
    #allocation10 [shape = 's32[1]{0}', space=sflag, size = 0x4, scoped, tag = 'scoped memory for tpu_custom_call.1']
    #allocation11 [shape = 'u8[32768]{0}', space=vmem, size = 0x8000, scoped, tag = 'input window, operand 5, single buffered']
    #allocation12 [shape = 'u8[8192]{0}', space=vmem, size = 0x2000, scoped, tag = 'output window, operand 0, single buffered']
    %11 = vsyncpa [#allocation4], 0
    %12 = vsyncpa [#allocation7], 0
    %13 = vsyncpa [#allocation10], 0
    %14 = vsyncpa [#allocation5], 0
    // Predicated region
    $region2: #{tpu_custom_call.1} parent=1 // pred_check
      _
    $region3: #{tpu_custom_call.1} parent=1 // pred_check_branch
      %16 = sbr.rel (0) target = $region5
    $region4: #{tpu_custom_call.1} parent=1 // pred_region
      %s18 = ssub.s32 128, 128
      %19 = vsyncadd [#allocation4], %s18
      %s20 = sshll.u32 [#allocation3], 4
      %s21 = int_to_ptr.vmem [resolvable:$true] %s20
      %26 = dma.hbm_to_vmem [thread:$0]  %s0, 128, %s21, [#allocation4], 64, 64, 4
    $region5: #{tpu_custom_call.1} parent=1 // pred_fallthru
      _
    // Predicated region
    $region6: #{tpu_custom_call.1} parent=1 // pred_check
      _
    $region7: #{tpu_custom_call.1} parent=1 // pred_check_branch
      %28 = sbr.rel (0) target = $region9
    $region8: #{tpu_custom_call.1} parent=1 // pred_region
      %s30 = ssub.s32 256, 256
      %31 = vsyncadd [#allocation7], %s30
      %s32 = sshll.u32 [#allocation6], 4
      %s33 = int_to_ptr.vmem [resolvable:$true] %s32
      %38 = dma.hbm_to_vmem [thread:$0]  %s1, 256, %s33, [#allocation7], 128, 128, 8
    $region9: #{tpu_custom_call.1} parent=1 // pred_fallthru
      _
    // Predicated region
    $region10: #{tpu_custom_call.1} parent=1 // pred_check
      _
    $region11: #{tpu_custom_call.1} parent=1 // pred_check_branch
      %40 = sbr.rel (0) target = $region13
    $region12: #{tpu_custom_call.1} parent=1 // pred_region
      _
    $region13: #{tpu_custom_call.1} parent=1 // pred_fallthru
      _
    // Predicated region
    $region14: #{tpu_custom_call.1} parent=1 // pred_check
      _
    $region15: #{tpu_custom_call.1} parent=1 // pred_check_branch
      %42 = sbr.rel (0) target = $region17
    $region16: #{tpu_custom_call.1} parent=1 // pred_region
      %s44 = ssub.s32 1024, 1024
      %45 = vsyncadd [#allocation7], %s44
      %s46 = sshll.u32 [#allocation8], 4
      %s47 = int_to_ptr.vmem [resolvable:$true] %s46
      %52 = dma.hbm_to_vmem [thread:$0]  %s3, 1024, %s47, [#allocation7], 64, 64, 4
    $region17: #{tpu_custom_call.1} parent=1 // pred_fallthru
      _
    // Predicated region
    $region18: #{tpu_custom_call.1} parent=1 // pred_check
      _
    $region19: #{tpu_custom_call.1} parent=1 // pred_check_branch
      %54 = sbr.rel (0) target = $region21
    $region20: #{tpu_custom_call.1} parent=1 // pred_region
      %s56 = ssub.s32 1024, 1024
      %57 = vsyncadd [#allocation10], %s56
      %s58 = sshll.u32 [#allocation9], 4
      %s59 = int_to_ptr.vmem [resolvable:$true] %s58
      %64 = dma.hbm_to_vmem [thread:$0]  %s4, 1024, %s59, [#allocation10], 64, 64, 4
    $region21: #{tpu_custom_call.1} parent=1 // pred_fallthru
      _
    // Predicated region
    $region22: #{tpu_custom_call.1} parent=1 // pred_check
      _
    $region23: #{tpu_custom_call.1} parent=1 // pred_check_branch
      %66 = sbr.rel (0) target = $region25
    $region24: #{tpu_custom_call.1} parent=1 // pred_region
      %s68 = ssub.s32 1024, 1024
      %69 = vsyncadd [#allocation10], %s68
      %s70 = sshll.u32 [#allocation11], 4
      %s71 = int_to_ptr.vmem [resolvable:$true] %s70
      %76 = dma.hbm_to_vmem [thread:$0]  %s5, 1024, %s71, [#allocation10], 64, 64, 4
    $region25: #{tpu_custom_call.1} parent=1 // pred_fallthru
      _
    // Predicated region
    $region26: #{tpu_custom_call.1} parent=1 // pred_check
      _
    $region27: #{tpu_custom_call.1} parent=1 // pred_check_branch
      %78 = sbr.rel (0) target = $region29
    $region28: #{tpu_custom_call.1} parent=1 // pred_region
      %79 = dma.done [#allocation4], 128
    $region29: #{tpu_custom_call.1} parent=1 // pred_fallthru
      _
    // Predicated region
    $region30: #{tpu_custom_call.1} parent=1 // pred_check
      _
    $region31: #{tpu_custom_call.1} parent=1 // pred_check_branch
      %81 = sbr.rel (0) target = $region33
    $region32: #{tpu_custom_call.1} parent=1 // pred_region
      %82 = dma.done [#allocation7], 256
    $region33: #{tpu_custom_call.1} parent=1 // pred_fallthru
      _
    // Predicated region
    $region34: #{tpu_custom_call.1} parent=1 // pred_check
      _
    $region35: #{tpu_custom_call.1} parent=1 // pred_check_branch
      %84 = sbr.rel (0) target = $region37
    $region36: #{tpu_custom_call.1} parent=1 // pred_region
      %85 = dma.done [#allocation7], 1024
    $region37: #{tpu_custom_call.1} parent=1 // pred_fallthru
      _
    // Predicated region
    $region38: #{tpu_custom_call.1} parent=1 // pred_check
      _
    $region39: #{tpu_custom_call.1} parent=1 // pred_check_branch
      %87 = sbr.rel (0) target = $region41
    $region40: #{tpu_custom_call.1} parent=1 // pred_region
      %88 = dma.done [#allocation10], 1024
    $region41: #{tpu_custom_call.1} parent=1 // pred_fallthru
      _
    // Predicated region
    $region42: #{tpu_custom_call.1} parent=1 // pred_check
      _
    $region43: #{tpu_custom_call.1} parent=1 // pred_check_branch
      %90 = sbr.rel (0) target = $region45
    $region44: #{tpu_custom_call.1} parent=1 // pred_region
      %91 = dma.done [#allocation10], 1024
    $region45: #{tpu_custom_call.1} parent=1 // pred_fallthru
      _
    %p93 = scmp.eq.s32.totalorder 0, 0
    // Predicated region
    $region46: #{tpu_custom_call.1} parent=1 // pred_check
      %p94 = pneg %p93
    $region47: #{tpu_custom_call.1} parent=1 // pred_check_branch
      %96 = sbr.rel (%p94) target = $region49
    $region48: #{tpu_custom_call.1} parent=1 // pred_region
      %v97 = vld [vmem:[#allocation3] sm:$0xf]
      %v98 = vld [vmem:[#allocation3 + $0x4] sm:$0xf]
      %v99 = vld [vmem:[#allocation6] sm:$0xff]
      %v100 = vld [vmem:[#allocation6 + $0x8] sm:$0xff]
      %v101 = vpack.c.bf16 %v99, %v99
      %v102 = vpack.c.bf16 %v100, %v100
      %v103 = vld [vmem:[#allocation8] sm:$0xf]
      %v104 = vld [vmem:[#allocation8 + $0x4] sm:$0xf]
      %v105 = vld [vmem:[#allocation8 + $0x8] sm:$0xf]
      %v106 = vld [vmem:[#allocation8 + $0xc] sm:$0xf]
      %v107 = vld [vmem:[#allocation8 + $0x10] sm:$0xf]
      %v108 = vld [vmem:[#allocation8 + $0x14] sm:$0xf]
      %v109 = vld [vmem:[#allocation8 + $0x18] sm:$0xf]
      %v110 = vld [vmem:[#allocation8 + $0x1c] sm:$0xf]
      %v111 = vld [vmem:[#allocation8 + $0x20] sm:$0xf]
      %v112 = vld [vmem:[#allocation8 + $0x24] sm:$0xf]
      %v113 = vld [vmem:[#allocation8 + $0x28] sm:$0xf]
      %v114 = vld [vmem:[#allocation8 + $0x2c] sm:$0xf]
      %v115 = vld [vmem:[#allocation8 + $0x30] sm:$0xf]
      %v116 = vld [vmem:[#allocation8 + $0x34] sm:$0xf]
      %v117 = vld [vmem:[#allocation8 + $0x38] sm:$0xf]
      %v118 = vld [vmem:[#allocation8 + $0x3c] sm:$0xf]
      %v121 = vunpack.c.l.b16 %v97
      %v122 = vunpack.c.l.b16 %v98
      %v123 = vpack.c.b16 %v122, %v121
      %v141 = vunpack.c.l.b16 %v103
      %v142 = vunpack.c.l.b16 %v104
      %v143 = vunpack.c.l.b16 %v105
      %v144 = vunpack.c.l.b16 %v106
      %v145 = vunpack.c.l.b16 %v107
      %v146 = vunpack.c.l.b16 %v108
      %v147 = vunpack.c.l.b16 %v109
      %v148 = vunpack.c.l.b16 %v110
      %v149 = vunpack.c.l.b16 %v111
      %v150 = vunpack.c.l.b16 %v112
      %v151 = vunpack.c.l.b16 %v113
      %v152 = vunpack.c.l.b16 %v114
      %v153 = vunpack.c.l.b16 %v115
      %v154 = vunpack.c.l.b16 %v116
      %v155 = vunpack.c.l.b16 %v117
      %v156 = vunpack.c.l.b16 %v118
      %v157 = vpack.c.b16 %v142, %v141
      %v158 = vpack.c.b16 %v144, %v143
      %v159 = vpack.c.b16 %v146, %v145
      %v160 = vpack.c.b16 %v148, %v147
      %v161 = vpack.c.b16 %v150, %v149
      %v162 = vpack.c.b16 %v152, %v151
      %v163 = vpack.c.b16 %v154, %v153
      %v164 = vpack.c.b16 %v156, %v155
      %173 = vmatprep.subr.bf16.mxu0 0
      %174 = vmatpush1.bf16.msra.mxu0 %v157
      %175 = vmatprep.subr.bf16.mxu0 0
      %176 = vmatpush1.bf16.msra.mxu0 %v158
      %177 = vmatprep.subr.bf16.mxu0 0
      %178 = vmatpush1.bf16.msra.mxu0 %v159
      %179 = vmatprep.subr.bf16.mxu0 0
      %180 = vmatpush1.bf16.msra.mxu0 %v160
      %181 = vmatprep.subr.bf16.mxu0 0
      %182 = vmatpush1.bf16.msra.mxu0 %v161
      %183 = vmatprep.subr.bf16.mxu0 0
      %184 = vmatpush1.bf16.msra.mxu0 %v162
      %185 = vmatprep.subr.bf16.mxu0 0
      %186 = vmatpush1.bf16.msra.mxu0 %v163
      %187 = vmatprep.subr.bf16.mxu0 0
      %188 = vmatpush1.bf16.msra.mxu0 %v164
      %189 = vmatprep.subr.bf16.mxu0 0
      %190 = vmatpush1.bf16.msra.mxu0 0
      %191 = vmatprep.subr.bf16.mxu0 0
      %192 = vmatpush1.bf16.msra.mxu0 0
      %193 = vmatprep.subr.bf16.mxu0 0
      %194 = vmatpush1.bf16.msra.mxu0 0
      %195 = vmatprep.subr.bf16.mxu0 0
      %196 = vmatpush1.bf16.msra.mxu0 0
      %197 = vmatprep.subr.bf16.mxu0 0
      %198 = vmatpush1.bf16.msra.mxu0 0
      %199 = vmatprep.subr.bf16.mxu0 0
      %200 = vmatpush1.bf16.msra.mxu0 0
      %201 = vmatprep.subr.bf16.mxu0 0
      %202 = vmatpush1.bf16.msra.mxu0 0
      %203 = vmatprep.subr.bf16.mxu0 0
      %204 = vmatpush1.bf16.msra.mxu0 0
      %205 = vmatprep.mubr.bf16.mxu0 0
      %206 = vmatmul.mubr.bf16.gmra.mrb[0].mxu0 %v123
      %v207 = vpop.f32.mrb[0].mxu0
      %v208 = vadd.f32 0.0, %v207
      %v209 = vpop.f32.mrb[0].mxu0
      %v210 = vpop.f32.mrb[0].mxu0
      %v211 = vadd.f32 0.0, %v210
      %v212 = vpop.f32.mrb[0].mxu0
      %213 = vdwg.mxu0
      %v214 = vtanh.pop %v208
      %v215 = vtanh.pop %v211
      %v216 = vpack.c.bf16 %v214, %v214
      %v217 = vpack.c.bf16 %v215, %v215
      %218 = vmatprep.subr.bf16.mxu0 0
      %219 = vmatpush1.bf16.xpose.msra.mxu0 %v216
      %220 = vmatprep.subr.bf16.mxu0 0
      %221 = vmatpush1.bf16.xpose.msra.mxu0 0
      %222 = vmatprep.subr.bf16.mxu0 0
      %223 = vmatpush1.bf16.xpose.msra.mxu0 0
      %224 = vmatprep.subr.bf16.mxu0 0
      %225 = vmatpush1.bf16.xpose.msra.mxu0 0
      %226 = vmatprep.subr.bf16.mxu0 0
      %227 = vmatpush1.bf16.xpose.msra.mxu0 0
      %228 = vmatprep.subr.bf16.mxu0 0
      %229 = vmatpush1.bf16.xpose.msra.mxu0 0
      %230 = vmatprep.subr.bf16.mxu0 0
      %231 = vmatpush1.bf16.xpose.msra.mxu0 0
      %232 = vmatprep.subr.bf16.mxu0 0
      %233 = vmatpush1.bf16.xpose.msra.mxu0 0
      %234 = vmatprep.subr.bf16.mxu0 0
      %235 = vmatpush1.bf16.xpose.msra.mxu0 0
      %236 = vmatprep.subr.bf16.mxu0 0
      %237 = vmatpush1.bf16.xpose.msra.mxu0 0
      %238 = vmatprep.subr.bf16.mxu0 0
      %239 = vmatpush1.bf16.xpose.msra.mxu0 0
      %240 = vmatprep.subr.bf16.mxu0 0
      %241 = vmatpush1.bf16.xpose.msra.mxu0 0
      %242 = vmatprep.subr.bf16.mxu0 0
      %243 = vmatpush1.bf16.xpose.msra.mxu0 0
      %244 = vmatprep.subr.bf16.mxu0 0
      %245 = vmatpush1.bf16.xpose.msra.mxu0 0
      %246 = vmatprep.subr.bf16.mxu0 0
      %247 = vmatpush1.bf16.xpose.msra.mxu0 0
      %248 = vmatprep.subr.bf16.mxu0 0
      %249 = vmatpush1.bf16.xpose.msra.mxu0 0
      %250 = vmatprep.mubr.bf16.mxu0 0
      %251 = vmatmul.mubr.bf16.gmra.mrb[0].mxu0 %v101
      %v252 = vpop.f32.mrb[0].mxu0
      %v253 = vadd.f32 0.0, %v252
      %v254 = vpop.f32.mrb[0].mxu0
      %v255 = vpop.f32.mrb[0].mxu0
      %v256 = vpop.f32.mrb[0].mxu0
      %257 = vdwg.mxu0
      %258 = vmatprep.subr.bf16.mxu0 0
      %259 = vmatpush1.bf16.xpose.msra.mxu0 %v217
      %260 = vmatprep.subr.bf16.mxu0 0
      %261 = vmatpush1.bf16.xpose.msra.mxu0 0
      %262 = vmatprep.subr.bf16.mxu0 0
      %263 = vmatpush1.bf16.xpose.msra.mxu0 0
      %264 = vmatprep.subr.bf16.mxu0 0
      %265 = vmatpush1.bf16.xpose.msra.mxu0 0
      %266 = vmatprep.subr.bf16.mxu0 0
      %267 = vmatpush1.bf16.xpose.msra.mxu0 0
      %268 = vmatprep.subr.bf16.mxu0 0
      %269 = vmatpush1.bf16.xpose.msra.mxu0 0
      %270 = vmatprep.subr.bf16.mxu0 0
      %271 = vmatpush1.bf16.xpose.msra.mxu0 0
      %272 = vmatprep.subr.bf16.mxu0 0
      %273 = vmatpush1.bf16.xpose.msra.mxu0 0
      %274 = vmatprep.subr.bf16.mxu0 0
      %275 = vmatpush1.bf16.xpose.msra.mxu0 0
      %276 = vmatprep.subr.bf16.mxu0 0
      %277 = vmatpush1.bf16.xpose.msra.mxu0 0
      %278 = vmatprep.subr.bf16.mxu0 0
      %279 = vmatpush1.bf16.xpose.msra.mxu0 0
      %280 = vmatprep.subr.bf16.mxu0 0
      %281 = vmatpush1.bf16.xpose.msra.mxu0 0
      %282 = vmatprep.subr.bf16.mxu0 0
      %283 = vmatpush1.bf16.xpose.msra.mxu0 0
      %284 = vmatprep.subr.bf16.mxu0 0
      %285 = vmatpush1.bf16.xpose.msra.mxu0 0
      %286 = vmatprep.subr.bf16.mxu0 0
      %287 = vmatpush1.bf16.xpose.msra.mxu0 0
      %288 = vmatprep.subr.bf16.mxu0 0
      %289 = vmatpush1.bf16.xpose.msra.mxu0 0
      %290 = vmatprep.mubr.bf16.mxu0 0
      %291 = vmatmul.mubr.bf16.gmra.mrb[0].mxu0 %v102
      %v292 = vpop.f32.mrb[0].mxu0
      %v293 = vadd.f32 0.0, %v292
      %v294 = vpop.f32.mrb[0].mxu0
      %v295 = vpop.f32.mrb[0].mxu0
      %v296 = vpop.f32.mrb[0].mxu0
      %297 = vdwg.mxu0
      %v298 = vld [vmem:[%s2] sm:$0x1]
      %v299 = vld [vmem:[%s2 + $0x1] sm:$0x1]
      %vm300 = vcmp.gt.f32.partialorder %v298, 0.5
      %vm301 = vcmp.gt.f32.partialorder %v299, 0.5
      %v302 = vsel %vm300, 1, 0
      %v303 = vsel %vm301, 1, 0
      %v304 = vlaneseq
      %v305 = vshrl.u32 %v304, 7
      %v306 = vsub.s32 0, %v305
      %v307 = vrot.slane %v302, %v306
      %v308 = vlaneseq
      %v309 = vshrl.u32 %v308, 7
      %v310 = vsub.s32 0, %v309
      %v311 = vrot.slane %v303, %v310
      %vm312 = vcmp.eq.s32.totalorder %v307, 1
      %vm313 = vcmp.eq.s32.totalorder %v311, 1
      %v314 = vsel %vm312, %v253, -1e+09
      %v315 = vsel %vm313, %v293, -1e+09
      %vm316 = vcmask 64512
      %v317 = vsel %vm316, %v314, -inf
      %318 = vmax.xlane.f32.xlu0 %v317
      %v319 = vpop.xlane.xlu0 %318
      %v320 = vsel %vm316, %v315, -inf
      %321 = vmax.xlane.f32.xlu0 %v320
      %v322 = vpop.xlane.xlu0 %321
      %v323 = vsub.f32 %v314, %v319
      %v324 = vsub.f32 %v315, %v322
      %v325 = vmul.f32 %v323, 1.442695
      %v326 = vpow.pop %v325
      %v327 = vmul.f32 %v324, 1.442695
      %v328 = vpow.pop %v327
      %v329 = vsel %vm316, %v326, 0.0
      %330 = vadd.xlane.f32.xlu0 %v329
      %v331 = vpop.xlane.xlu0 %330
      %v332 = vsel %vm316, %v328, 0.0
      %333 = vadd.xlane.f32.xlu0 %v332
      %v334 = vpop.xlane.xlu0 %333
      %v335 = vrcp.pop %v331
      %v336 = vmul.f32 %v326, %v335
      %v337 = vrcp.pop %v334
      %v338 = vmul.f32 %v328, %v337
      %v339 = vpack.c.bf16 %v336, %v336
      %v340 = vpack.c.bf16 %v338, %v338
      %v342 = vsel %vm316, %v339, 0
      %vm344 = vcmask 1043456
      %v346 = vsel %vm344, %v216, 0
      %348 = vmatprep.subr.bf16.mxu0 0
      %349 = vmatpush1.bf16.msra.mxu0 %v346
      %350 = vmatprep.subr.bf16.mxu0 0
      %351 = vmatpush1.bf16.msra.mxu0 0
      %352 = vmatprep.subr.bf16.mxu0 0
      %353 = vmatpush1.bf16.msra.mxu0 0
      %354 = vmatprep.subr.bf16.mxu0 0
      %355 = vmatpush1.bf16.msra.mxu0 0
      %356 = vmatprep.subr.bf16.mxu0 0
      %357 = vmatpush1.bf16.msra.mxu0 0
      %358 = vmatprep.subr.bf16.mxu0 0
      %359 = vmatpush1.bf16.msra.mxu0 0
      %360 = vmatprep.subr.bf16.mxu0 0
      %361 = vmatpush1.bf16.msra.mxu0 0
      %362 = vmatprep.subr.bf16.mxu0 0
      %363 = vmatpush1.bf16.msra.mxu0 0
      %364 = vmatprep.subr.bf16.mxu0 0
      %365 = vmatpush1.bf16.msra.mxu0 0
      %366 = vmatprep.subr.bf16.mxu0 0
      %367 = vmatpush1.bf16.msra.mxu0 0
      %368 = vmatprep.subr.bf16.mxu0 0
      %369 = vmatpush1.bf16.msra.mxu0 0
      %370 = vmatprep.subr.bf16.mxu0 0
      %371 = vmatpush1.bf16.msra.mxu0 0
      %372 = vmatprep.subr.bf16.mxu0 0
      %373 = vmatpush1.bf16.msra.mxu0 0
      %374 = vmatprep.subr.bf16.mxu0 0
      %375 = vmatpush1.bf16.msra.mxu0 0
      %376 = vmatprep.subr.bf16.mxu0 0
      %377 = vmatpush1.bf16.msra.mxu0 0
      %378 = vmatprep.subr.bf16.mxu0 0
      %379 = vmatpush1.bf16.msra.mxu0 0
      %380 = vmatprep.mubr.bf16.mxu0 0
      %381 = vmatmul.mubr.bf16.gmra.mrb[0].mxu0 %v342
      %v382 = vpop.f32.mrb[0].mxu0
      %v383 = vadd.f32 0.0, %v382
      %v384 = vpop.f32.mrb[0].mxu0
      %v385 = vpop.f32.mrb[0].mxu0
      %v386 = vpop.f32.mrb[0].mxu0
      %387 = vdwg.mxu0
      %v389 = vsel %vm316, %v340, 0
      %v392 = vsel %vm344, %v217, 0
      %394 = vmatprep.subr.bf16.mxu0 0
      %395 = vmatpush1.bf16.msra.mxu0 %v392
      %396 = vmatprep.subr.bf16.mxu0 0
      %397 = vmatpush1.bf16.msra.mxu0 0
      %398 = vmatprep.subr.bf16.mxu0 0
      %399 = vmatpush1.bf16.msra.mxu0 0
      %400 = vmatprep.subr.bf16.mxu0 0
      %401 = vmatpush1.bf16.msra.mxu0 0
      %402 = vmatprep.subr.bf16.mxu0 0
      %403 = vmatpush1.bf16.msra.mxu0 0
      %404 = vmatprep.subr.bf16.mxu0 0
      %405 = vmatpush1.bf16.msra.mxu0 0
      %406 = vmatprep.subr.bf16.mxu0 0
      %407 = vmatpush1.bf16.msra.mxu0 0
      %408 = vmatprep.subr.bf16.mxu0 0
      %409 = vmatpush1.bf16.msra.mxu0 0
      %410 = vmatprep.subr.bf16.mxu0 0
      %411 = vmatpush1.bf16.msra.mxu0 0
      %412 = vmatprep.subr.bf16.mxu0 0
      %413 = vmatpush1.bf16.msra.mxu0 0
      %414 = vmatprep.subr.bf16.mxu0 0
      %415 = vmatpush1.bf16.msra.mxu0 0
      %416 = vmatprep.subr.bf16.mxu0 0
      %417 = vmatpush1.bf16.msra.mxu0 0
      %418 = vmatprep.subr.bf16.mxu0 0
      %419 = vmatpush1.bf16.msra.mxu0 0
      %420 = vmatprep.subr.bf16.mxu0 0
      %421 = vmatpush1.bf16.msra.mxu0 0
      %422 = vmatprep.subr.bf16.mxu0 0
      %423 = vmatpush1.bf16.msra.mxu0 0
      %424 = vmatprep.subr.bf16.mxu0 0
      %425 = vmatpush1.bf16.msra.mxu0 0
      %426 = vmatprep.mubr.bf16.mxu0 0
      %427 = vmatmul.mubr.bf16.gmra.mrb[0].mxu0 %v389
      %v428 = vpop.f32.mrb[0].mxu0
      %v429 = vadd.f32 0.0, %v428
      %v430 = vpop.f32.mrb[0].mxu0
      %v431 = vpop.f32.mrb[0].mxu0
      %v432 = vpop.f32.mrb[0].mxu0
      %433 = vdwg.mxu0
      %v434 = vadd.f32 %v99, %v383
      %v435 = vadd.f32 %v100, %v429
      %v436 = vpack.c.bf16 %v434, %v434
      %v437 = vpack.c.bf16 %v435, %v435
      %v438 = vld [vmem:[#allocation9] sm:$0xf]
      %v439 = vld [vmem:[#allocation9 + $0x4] sm:$0xf]
      %v440 = vld [vmem:[#allocation9 + $0x8] sm:$0xf]
      %v441 = vld [vmem:[#allocation9 + $0xc] sm:$0xf]
      %v442 = vld [vmem:[#allocation9 + $0x10] sm:$0xf]
      %v443 = vld [vmem:[#allocation9 + $0x14] sm:$0xf]
      %v444 = vld [vmem:[#allocation9 + $0x18] sm:$0xf]
      %v445 = vld [vmem:[#allocation9 + $0x1c] sm:$0xf]
      %v446 = vld [vmem:[#allocation9 + $0x20] sm:$0xf]
      %v447 = vld [vmem:[#allocation9 + $0x24] sm:$0xf]
      %v448 = vld [vmem:[#allocation9 + $0x28] sm:$0xf]
      %v449 = vld [vmem:[#allocation9 + $0x2c] sm:$0xf]
      %v450 = vld [vmem:[#allocation9 + $0x30] sm:$0xf]
      %v451 = vld [vmem:[#allocation9 + $0x34] sm:$0xf]
      %v452 = vld [vmem:[#allocation9 + $0x38] sm:$0xf]
      %v453 = vld [vmem:[#allocation9 + $0x3c] sm:$0xf]
      %v456 = vunpack.c.l.b16 %v436
      %v457 = vunpack.c.l.b16 %v437
      %v458 = vpack.c.b16 %v457, %v456
      %v476 = vunpack.c.l.b16 %v438
      %v477 = vunpack.c.l.b16 %v439
      %v478 = vunpack.c.l.b16 %v440
      %v479 = vunpack.c.l.b16 %v441
      %v480 = vunpack.c.l.b16 %v442
      %v481 = vunpack.c.l.b16 %v443
      %v482 = vunpack.c.l.b16 %v444
      %v483 = vunpack.c.l.b16 %v445
      %v484 = vunpack.c.l.b16 %v446
      %v485 = vunpack.c.l.b16 %v447
      %v486 = vunpack.c.l.b16 %v448
      %v487 = vunpack.c.l.b16 %v449
      %v488 = vunpack.c.l.b16 %v450
      %v489 = vunpack.c.l.b16 %v451
      %v490 = vunpack.c.l.b16 %v452
      %v491 = vunpack.c.l.b16 %v453
      %v492 = vpack.c.b16 %v477, %v476
      %v493 = vpack.c.b16 %v479, %v478
      %v494 = vpack.c.b16 %v481, %v480
      %v495 = vpack.c.b16 %v483, %v482
      %v496 = vpack.c.b16 %v485, %v484
      %v497 = vpack.c.b16 %v487, %v486
      %v498 = vpack.c.b16 %v489, %v488
      %v499 = vpack.c.b16 %v491, %v490
      %508 = vmatprep.subr.bf16.mxu0 0
      %509 = vmatpush1.bf16.msra.mxu0 %v492
      %510 = vmatprep.subr.bf16.mxu0 0
      %511 = vmatpush1.bf16.msra.mxu0 %v493
      %512 = vmatprep.subr.bf16.mxu0 0
      %513 = vmatpush1.bf16.msra.mxu0 %v494
      %514 = vmatprep.subr.bf16.mxu0 0
      %515 = vmatpush1.bf16.msra.mxu0 %v495
      %516 = vmatprep.subr.bf16.mxu0 0
      %517 = vmatpush1.bf16.msra.mxu0 %v496
      %518 = vmatprep.subr.bf16.mxu0 0
      %519 = vmatpush1.bf16.msra.mxu0 %v497
      %520 = vmatprep.subr.bf16.mxu0 0
      %521 = vmatpush1.bf16.msra.mxu0 %v498
      %522 = vmatprep.subr.bf16.mxu0 0
      %523 = vmatpush1.bf16.msra.mxu0 %v499
      %524 = vmatprep.subr.bf16.mxu0 0
      %525 = vmatpush1.bf16.msra.mxu0 0
      %526 = vmatprep.subr.bf16.mxu0 0
      %527 = vmatpush1.bf16.msra.mxu0 0
      %528 = vmatprep.subr.bf16.mxu0 0
      %529 = vmatpush1.bf16.msra.mxu0 0
      %530 = vmatprep.subr.bf16.mxu0 0
      %531 = vmatpush1.bf16.msra.mxu0 0
      %532 = vmatprep.subr.bf16.mxu0 0
      %533 = vmatpush1.bf16.msra.mxu0 0
      %534 = vmatprep.subr.bf16.mxu0 0
      %535 = vmatpush1.bf16.msra.mxu0 0
      %536 = vmatprep.subr.bf16.mxu0 0
      %537 = vmatpush1.bf16.msra.mxu0 0
      %538 = vmatprep.subr.bf16.mxu0 0
      %539 = vmatpush1.bf16.msra.mxu0 0
      %540 = vmatprep.mubr.bf16.mxu0 0
      %541 = vmatmul.mubr.bf16.gmra.mrb[0].mxu0 %v458
      %v542 = vpop.f32.mrb[0].mxu0
      %v543 = vadd.f32 0.0, %v542
      %v544 = vpop.f32.mrb[0].mxu0
      %v545 = vpop.f32.mrb[0].mxu0
      %v546 = vadd.f32 0.0, %v545
      %v547 = vpop.f32.mrb[0].mxu0
      %548 = vdwg.mxu0
      %v549 = vtanh.pop %v543
      %v550 = vtanh.pop %v546
      %v551 = vpack.c.bf16 %v550, %v549
      %552 = vst [vmem:[#allocation2] sm:$0xff] %v551
    $region49: #{tpu_custom_call.1} parent=1 // pred_fallthru
      _
    %v553 = vld [vmem:[#allocation2] sm:$0xff]
    %v554 = vld [vmem:[#allocation11] sm:$0xf]
    %v555 = vld [vmem:[#allocation11 + $0x4] sm:$0xf]
    %v556 = vld [vmem:[#allocation11 + $0x8] sm:$0xf]
    %v557 = vld [vmem:[#allocation11 + $0xc] sm:$0xf]
    %v558 = vld [vmem:[#allocation11 + $0x10] sm:$0xf]
    %v559 = vld [vmem:[#allocation11 + $0x14] sm:$0xf]
    %v560 = vld [vmem:[#allocation11 + $0x18] sm:$0xf]
    %v561 = vld [vmem:[#allocation11 + $0x1c] sm:$0xf]
    %v562 = vld [vmem:[#allocation11 + $0x20] sm:$0xf]
    %v563 = vld [vmem:[#allocation11 + $0x24] sm:$0xf]
    %v564 = vld [vmem:[#allocation11 + $0x28] sm:$0xf]
    %v565 = vld [vmem:[#allocation11 + $0x2c] sm:$0xf]
    %v566 = vld [vmem:[#allocation11 + $0x30] sm:$0xf]
    %v567 = vld [vmem:[#allocation11 + $0x34] sm:$0xf]
    %v568 = vld [vmem:[#allocation11 + $0x38] sm:$0xf]
    %v569 = vld [vmem:[#allocation11 + $0x3c] sm:$0xf]
    %v586 = vunpack.c.l.b16 %v554
    %v587 = vunpack.c.l.b16 %v555
    %v588 = vunpack.c.l.b16 %v556
    %v589 = vunpack.c.l.b16 %v557
    %v590 = vunpack.c.l.b16 %v558
    %v591 = vunpack.c.l.b16 %v559
    %v592 = vunpack.c.l.b16 %v560
    %v593 = vunpack.c.l.b16 %v561
    %v594 = vunpack.c.l.b16 %v562
    %v595 = vunpack.c.l.b16 %v563
    %v596 = vunpack.c.l.b16 %v564
    %v597 = vunpack.c.l.b16 %v565
    %v598 = vunpack.c.l.b16 %v566
    %v599 = vunpack.c.l.b16 %v567
    %v600 = vunpack.c.l.b16 %v568
    %v601 = vunpack.c.l.b16 %v569
    %v602 = vpack.c.b16 %v587, %v586
    %v603 = vpack.c.b16 %v589, %v588
    %v604 = vpack.c.b16 %v591, %v590
    %v605 = vpack.c.b16 %v593, %v592
    %v606 = vpack.c.b16 %v595, %v594
    %v607 = vpack.c.b16 %v597, %v596
    %v608 = vpack.c.b16 %v599, %v598
    %v609 = vpack.c.b16 %v601, %v600
    %618 = vmatprep.subr.bf16.mxu0 0
    %619 = vmatpush1.bf16.msra.mxu0 %v602
    %620 = vmatprep.subr.bf16.mxu0 0
    %621 = vmatpush1.bf16.msra.mxu0 %v603
    %622 = vmatprep.subr.bf16.mxu0 0
    %623 = vmatpush1.bf16.msra.mxu0 %v604
    %624 = vmatprep.subr.bf16.mxu0 0
    %625 = vmatpush1.bf16.msra.mxu0 %v605
    %626 = vmatprep.subr.bf16.mxu0 0
    %627 = vmatpush1.bf16.msra.mxu0 %v606
    %628 = vmatprep.subr.bf16.mxu0 0
    %629 = vmatpush1.bf16.msra.mxu0 %v607
    %630 = vmatprep.subr.bf16.mxu0 0
    %631 = vmatpush1.bf16.msra.mxu0 %v608
    %632 = vmatprep.subr.bf16.mxu0 0
    %633 = vmatpush1.bf16.msra.mxu0 %v609
    %634 = vmatprep.subr.bf16.mxu0 0
    %635 = vmatpush1.bf16.msra.mxu0 0
    %636 = vmatprep.subr.bf16.mxu0 0
    %637 = vmatpush1.bf16.msra.mxu0 0
    %638 = vmatprep.subr.bf16.mxu0 0
    %639 = vmatpush1.bf16.msra.mxu0 0
    %640 = vmatprep.subr.bf16.mxu0 0
    %641 = vmatpush1.bf16.msra.mxu0 0
    %642 = vmatprep.subr.bf16.mxu0 0
    %643 = vmatpush1.bf16.msra.mxu0 0
    %644 = vmatprep.subr.bf16.mxu0 0
    %645 = vmatpush1.bf16.msra.mxu0 0
    %646 = vmatprep.subr.bf16.mxu0 0
    %647 = vmatpush1.bf16.msra.mxu0 0
    %648 = vmatprep.subr.bf16.mxu0 0
    %649 = vmatpush1.bf16.msra.mxu0 0
    %650 = vmatprep.mubr.bf16.mxu0 0
    %651 = vmatmul.mubr.bf16.gmra.mrb[0].mxu0 %v553
    %v652 = vpop.f32.mrb[0].mxu0
    %v653 = vadd.f32 0.0, %v652
    %v654 = vpop.f32.mrb[0].mxu0
    %v655 = vpop.f32.mrb[0].mxu0
    %v656 = vadd.f32 0.0, %v655
    %v657 = vpop.f32.mrb[0].mxu0
    %658 = vdwg.mxu0
    %659 = vst [vmem:[#allocation12] sm:$0xff] %v653
    %660 = vst [vmem:[#allocation12 + $0x8] sm:$0xff] %v656
    // Predicated region
    $region50: #{tpu_custom_call.1} parent=1 // pred_check
      _
    $region51: #{tpu_custom_call.1} parent=1 // pred_check_branch
      %662 = sbr.rel (0) target = $region53
    $region52: #{tpu_custom_call.1} parent=1 // pred_region
      %s664 = ssub.s32 256, 256
      %665 = vsyncadd [#allocation5], %s664
      %s666 = sshll.u32 [#allocation12], 4
      %s667 = int_to_ptr.vmem [resolvable:$true] %s666
      %672 = dma.vmem_to_hbm [thread:$0]  %s667, 256, %s6, [#allocation5], 128, 128, 8
    $region53: #{tpu_custom_call.1} parent=1 // pred_fallthru
      _
    // Predicated region
    $region54: #{tpu_custom_call.1} parent=1 // pred_check
      _
    $region55: #{tpu_custom_call.1} parent=1 // pred_check_branch
      %674 = sbr.rel (0) target = $region57
    $region56: #{tpu_custom_call.1} parent=1 // pred_region
      %675 = dma.done [#allocation5], 256
    $region57: #{tpu_custom_call.1} parent=1 // pred_fallthru
      _
    %676 = vsyncpa [#allocation4], 1
    %677 = vsyncpa [#allocation7], 1
    %678 = vsyncpa [#allocation10], 1
    %679 = vsyncpa [#allocation5], 1

</llo_original>
